<compile_context>
chip_gen: v7x
topology: tpu7x:2x2x1
jax: 0.10.0
libtpu: 0.0.40
codegen_flags: <defaults>
</compile_context>

<pallas_src>
import math
import jax
import jax.numpy as jnp
from jax.experimental import pallas as pl
from jax.experimental.pallas import tpu as pltpu

BN_EPS = 1e-5   # torch.nn.BatchNorm1d default eps


# ---------------- fused Pallas kernel ----------------

def complex_linear_kernel(x_ref, w_ref, b_ref, o_ref, acc_ref):
    # out = relu(x @ W_fused + b_fused); K-tiled accumulation in f32 scratch.
    k = pl.program_id(2)

    @pl.when(k == 0)
    def _():
        acc_ref[...] = jnp.zeros_like(acc_ref)

    acc_ref[...] += jnp.dot(x_ref[...], w_ref[...],
                            preferred_element_type=jnp.float32)

    @pl.when(k == pl.num_programs(2) - 1)
    def _():
        # f32 epilogue: fused bias/BN shift + ReLU, stored once.
        o_ref[...] = jnp.maximum(acc_ref[...] + b_ref[...], 0.0)


# ---------------- tiling / budget helpers ----------------

def _round_up(x, m):
    return -(-x // m) * m


def _pick_batch_tile(B):
    if B <= 8:
        return B
    # Aim for >=2 programs on the (parallel) batch axis -- v7x has 2 TensorCores --
    # capped at 512 rows to amortize per-step overhead without blowing VMEM.
    return max(8, min(512, _round_up(-(-B // 2), 8)))


def _pick_k_tile(d_in):
    # Only split the contraction dim on exact divisors: a ragged K block would
    # feed undefined padding into the accumulator.
    if d_in <= 4096:
        return d_in
    for cand in (4096, 2048, 1024, 512):
        if d_in % cand == 0:
            return cand
    return d_in


def _pick_n_tile(d_out_pad):
    for cand in (512, 256, 128):
        if d_out_pad % cand == 0:
            return cand
    return d_out_pad


def _pad_out_features(d_out):
    # Lane-dense output (unmasked vst). Beyond 128, pad with 256 granularity so
    # N tiles fill the 2x256 MXU on v6e/v7x (128 is already full-width on v5e).
    if d_out <= 128:
        return _round_up(d_out, 128)
    return _round_up(d_out, 256)


def _vmem_limit_bytes():
    # Per-generation budget: ~96 MiB on v5e/v6e (128 MiB physical),
    # ~48 MiB on v7x (64 MiB physical).
    try:
        phys = int(pltpu.get_tpu_info().vmem_capacity_bytes)
    except Exception:
        phys = 64 * 1024 * 1024
    return min(phys * 3 // 4, 96 * 1024 * 1024)


# ---------------- wrapper ----------------

def complex_linear_forward(x, w_fused, b_fused, d_out):
    """x: (B, 2*in_dim) f32 -> (B, 2*out_dim) f32, computed as relu(x @ W + b)."""
    B, d_in = x.shape
    d_out_pad = w_fused.shape[1]

    b_tile = _pick_batch_tile(B)
    tk = _pick_k_tile(d_in)
    tn = _pick_n_tile(d_out_pad)
    n_i = pl.cdiv(B, b_tile)          # ragged last batch block: extra rows are dropped
    n_j = d_out_pad // tn
    n_k = d_in // tk
    grid = (n_i, n_j, n_k)

    # bf16 operands for the MXU; accumulation stays f32 (preferred_element_type).
    x_op = x.astype(jnp.bfloat16)
    w_op = w_fused.astype(jnp.bfloat16)

    # Single-buffer weight/bias when their block index never changes across the
    # grid -- halves their VMEM footprint (matters most on v7x's 64 MiB VMEM).
    if n_j == 1 and n_k == 1:
        w_spec = pl.BlockSpec((tk, tn), lambda i, j, k: (k, j),
                              pipeline_mode=pl.Buffered(1))
        b_spec = pl.BlockSpec((1, tn), lambda i, j, k: (0, j),
                              pipeline_mode=pl.Buffered(1))
    else:
        w_spec = pl.BlockSpec((tk, tn), lambda i, j, k: (k, j))
        b_spec = pl.BlockSpec((1, tn), lambda i, j, k: (0, j))

    flops = 2 * B * d_in * d_out_pad
    bytes_accessed = (B * d_in * 2            # x (bf16)
                      + d_in * d_out_pad * 2  # W (bf16)
                      + d_out_pad * 4         # bias (f32)
                      + B * d_out_pad * 4)    # output (f32)

    out = pl.pallas_call(
        complex_linear_kernel,
        out_shape=jax.ShapeDtypeStruct((B, d_out_pad), jnp.float32),
        grid_spec=pltpu.PrefetchScalarGridSpec(
            num_scalar_prefetch=0,
            grid=grid,
            in_specs=[
                pl.BlockSpec((b_tile, tk), lambda i, j, k: (i, k)),  # activations
                w_spec,                                              # fused weights
                b_spec,                                              # fused bias/BN shift
            ],
            out_specs=pl.BlockSpec((b_tile, tn), lambda i, j, k: (i, j)),
            scratch_shapes=[pltpu.VMEM((b_tile, tn), jnp.float32)],  # f32 accumulator
        ),
        compiler_params=pltpu.CompilerParams(
            dimension_semantics=("parallel", "parallel", "arbitrary"),
            vmem_limit_bytes=_vmem_limit_bytes(),
        ),
        cost_estimate=pl.CostEstimate(
            flops=flops, transcendentals=0, bytes_accessed=bytes_accessed),
    )(x_op, w_op, b_fused)

    if d_out_pad == d_out:
        return out                    # already lane-aligned: no pad/slice overhead
    return out[:, :d_out]


# ---------------- parameter construction + offline folding ----------------

def init_params(key, in_dim, out_dim):
    """Synthetic PyTorch-style parameters (nn.Linear init + BN affine/running stats)."""
    ks = jax.random.split(key, 12)
    bound = 1.0 / math.sqrt(in_dim)
    return dict(
        w_r=jax.random.uniform(ks[0], (out_dim, in_dim), jnp.float32, -bound, bound),
        b_r=jax.random.uniform(ks[1], (out_dim,), jnp.float32, -bound, bound),
        w_i=jax.random.uniform(ks[2], (out_dim, in_dim), jnp.float32, -bound, bound),
        b_i=jax.random.uniform(ks[3], (out_dim,), jnp.float32, -bound, bound),
        gamma_r=1.0 + 0.1 * jax.random.normal(ks[4], (out_dim,), jnp.float32),
        beta_r=0.1 * jax.random.normal(ks[5], (out_dim,), jnp.float32),
        mean_r=0.1 * jax.random.normal(ks[6], (out_dim,), jnp.float32),
        var_r=jnp.abs(1.0 + 0.1 * jax.random.normal(ks[7], (out_dim,), jnp.float32)),
        gamma_i=1.0 + 0.1 * jax.random.normal(ks[8], (out_dim,), jnp.float32),
        beta_i=0.1 * jax.random.normal(ks[9], (out_dim,), jnp.float32),
        mean_i=0.1 * jax.random.normal(ks[10], (out_dim,), jnp.float32),
        var_i=jnp.abs(1.0 + 0.1 * jax.random.normal(ks[11], (out_dim,), jnp.float32)),
    )


def fold_params(p):
    """Fold complex real/imag linear structure + biases + eval-mode BN into one
    (2*in_dim, d_out_pad) weight and one (1, d_out_pad) shift (lane-padded)."""
    w_r, w_i = p["w_r"], p["w_i"]            # PyTorch (out_dim, in_dim) layout
    out_dim = w_r.shape[0]

    # pre_real = real @ W_r^T - imag @ W_i^T + (b_r - b_i)
    # pre_imag = real @ W_i^T + imag @ W_r^T + (b_i + b_r)
    w_big = jnp.concatenate([
        jnp.concatenate([w_r.T, w_i.T], axis=1),    # rows fed by the `real` half of x
        jnp.concatenate([-w_i.T, w_r.T], axis=1),   # rows fed by the `imag` half of x
    ], axis=0)                                       # (2*in_dim, 2*out_dim)
    b_big = jnp.concatenate([p["b_r"] - p["b_i"], p["b_i"] + p["b_r"]])

    # eval-mode BatchNorm: y * scale + shift
    scale_r = p["gamma_r"] * jax.lax.rsqrt(p["var_r"] + BN_EPS)
    shift_r = p["beta_r"] - p["mean_r"] * scale_r
    scale_i = p["gamma_i"] * jax.lax.rsqrt(p["var_i"] + BN_EPS)
    shift_i = p["beta_i"] - p["mean_i"] * scale_i
    scale = jnp.concatenate([scale_r, scale_i])
    shift = jnp.concatenate([shift_r, shift_i])

    w_fused = w_big * scale[None, :]
    b_fused = (b_big * scale + shift)[None, :]       # (1, 2*out_dim)

    # pad output features (lane-dense stores); padded columns are all-zero and
    # sliced off after the kernel when padding was needed.
    d_out = 2 * out_dim
    d_out_pad = _pad_out_features(d_out)
    if d_out_pad != d_out:
        w_fused = jnp.pad(w_fused, ((0, 0), (0, d_out_pad - d_out)))
        b_fused = jnp.pad(b_fused, ((0, 0), (0, d_out_pad - d_out)))
    return w_fused, b_fused


# ---------------- pure-JAX reference (PyTorch forward, relu branch) ----------------

def reference_forward(x, p):
    in_dim = x.shape[-1] // 2
    real, imag = x[:, :in_dim], x[:, in_dim:]
    pre_r = (real @ p["w_r"].T + p["b_r"]) - (imag @ p["w_i"].T + p["b_i"])
    pre_i = (real @ p["w_i"].T + p["b_i"]) + (imag @ p["w_r"].T + p["b_r"])
    bn_r = (pre_r - p["mean_r"]) * jax.lax.rsqrt(p["var_r"] + BN_EPS) * p["gamma_r"] + p["beta_r"]
    bn_i = (pre_i - p["mean_i"]) * jax.lax.rsqrt(p["var_i"] + BN_EPS) * p["gamma_i"] + p["beta_i"]
    return jnp.concatenate([jnp.maximum(bn_r, 0.0), jnp.maximum(bn_i, 0.0)], axis=-1)


if __name__ == "__main__":
    batch, in_dim, out_dim = 16, 16, 16     # x: (16, 32) -> out: (16, 32)

    key = jax.random.PRNGKey(0)
    kx, kp = jax.random.split(key)
    x = jax.random.normal(kx, (batch, 2 * in_dim), jnp.float32)

    params = init_params(kp, in_dim, out_dim)
    w_fused, b_fused = fold_params(params)

    out = complex_linear_forward(x, w_fused, b_fused, 2 * out_dim)
    out = jax.block_until_ready(out)

    assert out.shape == (batch, 2 * out_dim), out.shape
    ref = reference_forward(x, params)
    err = float(jnp.max(jnp.abs(out - ref)))
    # tolerance loosened slightly vs f32-only version: matmul operands are bf16
    assert err < 2e-2, err
    print("KERNEL_OK")
</pallas_src>

<mosaic_0001>
module attributes {stable_mosaic.version = 11 : i64} {
  func.func @complex_linear_kernel(%arg0: i32, %arg1: i32, %arg2: i32, %arg3: memref<8x32xbf16, #tpu.memory_space<vmem>>, %arg4: memref<32x128xbf16, #tpu.memory_space<vmem>>, %arg5: memref<1x128xf32, #tpu.memory_space<vmem>>, %arg6: memref<8x128xf32, #tpu.memory_space<vmem>>, %arg7: memref<8x128xf32, #tpu.memory_space<vmem>>) attributes {dimension_semantics = [#tpu.dimension_semantics<parallel>, #tpu.dimension_semantics<parallel>, #tpu.dimension_semantics<arbitrary>], iteration_bounds = array<i64: 2, 1, 1>, scalar_prefetch = 0 : i64, scratch_operands = 1 : i64, tpu.core_type = #tpu.core_type<tc>, window_params = [{transform_indices = @transform_0, window_bounds = array<i64: 8, 32>}, {pipeline_mode = #tpu.pipeline_mode<synchronous>, transform_indices = @transform_1, window_bounds = array<i64: 32, 128>}, {pipeline_mode = #tpu.pipeline_mode<synchronous>, transform_indices = @transform_2, window_bounds = array<i64: 1, 128>}, {transform_indices = @transform_3, window_bounds = array<i64: 8, 128>}]} {
    %c0_i32 = arith.constant 0 : i32
    %0 = arith.cmpi eq, %arg2, %c0_i32 : i32
    %1 = arith.extui %0 : i1 to i32
    %c0_i32_0 = arith.constant 0 : i32
    %2 = arith.cmpi ne, %1, %c0_i32_0 : i32
    scf.if %2 {
      %cst_10 = arith.constant 0.000000e+00 : f32
      %12 = vector.broadcast %cst_10 : f32 to vector<8x128xf32>
      %c0_11 = arith.constant 0 : index
      %c0_12 = arith.constant 0 : index
      %13 = vector.load %arg7[%c0_11, %c0_12] : memref<8x128xf32, #tpu.memory_space<vmem>>, vector<8x128xf32>
      tpu.vector_store %arg7[%c0_11, %c0_12], %12 {strides = array<i32>} : memref<8x128xf32, #tpu.memory_space<vmem>>, vector<8x128xf32>,
    } else {
    }
    %c0 = arith.constant 0 : index
    %c0_1 = arith.constant 0 : index
    %3 = vector.load %arg7[%c0, %c0_1] : memref<8x128xf32, #tpu.memory_space<vmem>>, vector<8x128xf32>
    %c0_2 = arith.constant 0 : index
    %c0_3 = arith.constant 0 : index
    %4 = vector.load %arg3[%c0_2, %c0_3] : memref<8x32xbf16, #tpu.memory_space<vmem>>, vector<8x32xbf16>
    %c0_4 = arith.constant 0 : index
    %c0_5 = arith.constant 0 : index
    %5 = vector.load %arg4[%c0_4, %c0_5] : memref<32x128xbf16, #tpu.memory_space<vmem>>, vector<32x128xbf16>
    %cst = arith.constant dense<0.000000e+00> : vector<8x128xf32>
    %6 = tpu.matmul %4, %5, %cst {dimension_numbers = #tpu.dot_dimension_numbers<[1], [0], [0], [1], [0, 0, 1, 1], [], []>} : vector<8x32xbf16>, vector<32x128xbf16>, vector<8x128xf32> -> vector<8x128xf32>
    %7 = arith.addf %3, %6 : vector<8x128xf32>
    %c0_6 = arith.constant 0 : index
    %c0_7 = arith.constant 0 : index
    %8 = vector.load %arg7[%c0_6, %c0_7] : memref<8x128xf32, #tpu.memory_space<vmem>>, vector<8x128xf32>
    tpu.vector_store %arg7[%c0_6, %c0_7], %7 {strides = array<i32>} : memref<8x128xf32, #tpu.memory_space<vmem>>, vector<8x128xf32>,
    %c0_i32_8 = arith.constant 0 : i32
    %9 = arith.cmpi eq, %arg2, %c0_i32_8 : i32
    %10 = arith.extui %9 : i1 to i32
    %c0_i32_9 = arith.constant 0 : i32
    %11 = arith.cmpi ne, %10, %c0_i32_9 : i32
    scf.if %11 {
      %c0_10 = arith.constant 0 : index
      %c0_11 = arith.constant 0 : index
      %12 = vector.load %arg7[%c0_10, %c0_11] : memref<8x128xf32, #tpu.memory_space<vmem>>, vector<8x128xf32>
      %c0_12 = arith.constant 0 : index
      %c0_13 = arith.constant 0 : index
      %13 = vector.load %arg5[%c0_12, %c0_13] : memref<1x128xf32, #tpu.memory_space<vmem>>, vector<1x128xf32>
      %14 = vector.broadcast %13 : vector<1x128xf32> to vector<8x128xf32>
      %15 = arith.addf %12, %14 : vector<8x128xf32>
      %cst_14 = arith.constant 0.000000e+00 : f32
      %16 = vector.broadcast %cst_14 : f32 to vector<8x128xf32>
      %17 = arith.maximumf %15, %16 : vector<8x128xf32>
      %c0_15 = arith.constant 0 : index
      %c0_16 = arith.constant 0 : index
      %18 = vector.load %arg6[%c0_15, %c0_16] : memref<8x128xf32, #tpu.memory_space<vmem>>, vector<8x128xf32>
      tpu.vector_store %arg6[%c0_15, %c0_16], %17 {strides = array<i32>} : memref<8x128xf32, #tpu.memory_space<vmem>>, vector<8x128xf32>,
    } else {
    }
    return
  }
  func.func @transform_0(%arg0: i32, %arg1: i32, %arg2: i32) -> (i32, i32) {
    %c0_i32 = arith.constant 0 : i32
    return %arg0, %arg2 : i32, i32
  }
  func.func @transform_1(%arg0: i32, %arg1: i32, %arg2: i32) -> (i32, i32) {
    %c0_i32 = arith.constant 0 : i32
    return %arg2, %arg1 : i32, i32
  }
  func.func @transform_2(%arg0: i32, %arg1: i32, %arg2: i32) -> (i32, i32) {
    %c0_i32 = arith.constant 0 : i32
    %c0_i32_0 = arith.constant 0 : i32
    return %c0_i32, %arg1 : i32, i32
  }
  func.func @transform_3(%arg0: i32, %arg1: i32, %arg2: i32) -> (i32, i32) {
    %c0_i32 = arith.constant 0 : i32
    return %arg0, %arg1 : i32, i32
  }
}

</mosaic_0001>

<llo_original>
// kernel: tpu_custom_call.1
$region0: #{tpu_custom_call.1}
  #allocation0 [shape = 'u32[]', space=smem, size = 0x4, offset = 0x4, fixed_abs, tag = 'smem constant byte address 0x4 - core index']
  #allocation1 [shape = 'u32[144,128]{1,0:T(1,128)}', space=vmem, size = 0x12000, scoped, tag = 'internal scratch']
  #allocation2 [shape = 'f32[8,128]{1,0:T(8,128)}', space=vmem, size = 0x1000, scoped, tag = 'scratch operand']
  %s0 = inlined_call_operand.hbm [shape: bf16[16,32], index: 0, kind: input, shape index: {}]
  %s1 = inlined_call_operand.hbm [shape: bf16[32,128], index: 1, kind: input, shape index: {}]
  %s2 = inlined_call_operand.vmem [shape: f32[1,128], index: 2, kind: input, shape index: {}]
  %s3 = inlined_call_operand.hbm [shape: f32[16,128], index: 3, kind: output, shape index: {}]
  %s4 = sld [smem:[#allocation0]]
  $region61: #{tpu_custom_call.1} parent=0
    _
  %s6 = ssub.s32 1, %s4
  %s7 = scalar_select 0, %s6, %s4
  $region1: #{tpu_custom_call.1} parent=0
    #allocation3 [shape = 'u8[4096]{0}', space=vmem, size = 0x1000, scoped, tag = 'input window, operand 0']
    #allocation4 [shape = 's32[2]{0}', space=sflag, size = 0x8, scoped, tag = 'scoped memory for tpu_custom_call.1']
    #allocation5 [shape = 's32[2]{0}', space=sflag, size = 0x8, scoped, tag = 'scoped memory for tpu_custom_call.1']
    #allocation6 [shape = 'u8[8192]{0}', space=vmem, size = 0x2000, scoped, tag = 'input window, operand 1, single buffered']
    #allocation7 [shape = 's32[1]{0}', space=sflag, size = 0x4, scoped, tag = 'scoped memory for tpu_custom_call.1']
    #allocation8 [shape = 'u8[8192]{0}', space=vmem, size = 0x2000, scoped, tag = 'output window, operand 0']
    %8 = vsyncpa [#allocation4], 0
    %s9 = scalar_lea.sflag [#allocation4], 1
    %10 = vsyncpa %s9, 0
    %11 = vsyncpa [#allocation7], 0
    %12 = vsyncpa [#allocation5], 0
    %s13 = scalar_lea.sflag [#allocation5], 1
    %14 = vsyncpa %s13, 0
    loop: start=0, step=1, limit=4
    $region2: #{tpu_custom_call.1} parent=1 // loop_pre_header
      _
    $region3: #{tpu_custom_call.1} parent=1 // loop_header
      %s16 = sphi 0, %s20
      %p17 = scmp.ge.s32.totalorder %s16, 4
      %s23 = sphi 0, %s42
      %s24 = sphi 0, %s38
      %s25 = sphi 0, %s34
      %s26 = sphi 0, %s23
      %s27 = sphi 0, %s24
      %s28 = sphi 0, %s25
      %s29 = sphi 0, %s26
      %s30 = sphi 0, %s27
      %s31 = sphi 0, %s28
      %s47 = sphi 0, %s49
      %s50 = sphi 0, %s47
      %s51 = sphi 0, %s50
      %s67 = sphi 0, %s51
      %s75 = sphi 0, %s77
      %s78 = sphi 0, %s75
      %s79 = sphi 0, %s78
      %s95 = sphi 0, %s79
      %s101 = sphi 0, %s103
      %s104 = sphi 0, %s101
      %s105 = sphi 0, %s104
      %s121 = sphi 0, %s105
      %s129 = sphi 0, %s131
      %s132 = sphi 0, %s129
      %s133 = sphi 0, %s132
      %s149 = sphi 0, %s133
    $region4: #{tpu_custom_call.1} parent=1 // loop_header_branch
      %19 = sbr.rel (%p17) target = $region8
    $region5: #{tpu_custom_call.1} parent=1 // loop_body
      %s21 = ssub.s32 %s16, 1
      %s22 = ssub.s32 %s16, 2
      %s32 = sadd.s32 1, %s25
      %p33 = scmp.ge.s32.totalorder %s32, 1
      %s34 = scalar_select %p33, 0, %s32
      %s35 = sadd.s32 1, %s24
      %s36 = scalar_select %p33, %s35, %s24
      %p37 = scmp.ge.s32.totalorder %s36, 1
      %s38 = scalar_select %p37, 0, %s36
      %s39 = sadd.s32 1, %s23
      %s40 = scalar_select %p37, %s39, %s23
      %p41 = scmp.ge.s32.totalorder %s40, 2
      %s42 = scalar_select %p41, 0, %s40
      %s43 = ssub.s32 %s23, %s42
      %s44 = ssub.s32 %s25, %s34
      %s45 = sor.u32 %s43, %s44
      %p46 = scmp.eq.s32.totalorder %s45, 0
      %s48 = sadd.s32 %s47, 1
      %s49 = scalar_select %p46, %s47, %s48
      %p52 = pneg %p46
      %p53 = scmp.eq.s32.totalorder %s16, 1
      %p54 = por %p52, %p53
      %p55 = scmp.ne.s32.totalorder %s47, %s50
      %p56 = scmp.eq.s32.totalorder %s16, 0
      %p57 = por %p55, %p56
      %p58 = scmp.ne.s32.totalorder %s47, %s50
      %p59 = scmp.eq.s32.totalorder %s21, 1
      %p60 = por %p58, %p59
      %p61 = scmp.ne.s32.totalorder %s50, %s51
      %p62 = scmp.eq.s32.totalorder %s21, 0
      %p63 = por %p61, %p62
      %p64 = scmp.ne.s32.totalorder %s50, %s51
      %p65 = scmp.eq.s32.totalorder %s22, 1
      %p66 = por %p64, %p65
      %p68 = scmp.ne.s32.totalorder %s51, %s67
      %p69 = scmp.eq.s32.totalorder %s22, 0
      %p70 = por %p68, %p69
      %s71 = ssub.s32 %s25, %s34
      %s72 = ssub.s32 %s24, %s38
      %s73 = sor.u32 %s71, %s72
      %p74 = scmp.eq.s32.totalorder %s73, 0
      %s76 = sadd.s32 %s75, 1
      %s77 = scalar_select %p74, %s75, %s76
      %p80 = pneg %p74
      %p81 = scmp.eq.s32.totalorder %s16, 1
      %p82 = por %p80, %p81
      %p83 = scmp.ne.s32.totalorder %s75, %s78
      %p84 = scmp.eq.s32.totalorder %s16, 0
      %p85 = por %p83, %p84
      %p86 = scmp.ne.s32.totalorder %s75, %s78
      %p87 = scmp.eq.s32.totalorder %s21, 1
      %p88 = por %p86, %p87
      %p89 = scmp.ne.s32.totalorder %s78, %s79
      %p90 = scmp.eq.s32.totalorder %s21, 0
      %p91 = por %p89, %p90
      %p92 = scmp.ne.s32.totalorder %s78, %s79
      %p93 = scmp.eq.s32.totalorder %s22, 1
      %p94 = por %p92, %p93
      %p96 = scmp.ne.s32.totalorder %s79, %s95
      %p97 = scmp.eq.s32.totalorder %s22, 0
      %p98 = por %p96, %p97
      %s99 = ssub.s32 %s24, %s38
      %p100 = scmp.eq.s32.totalorder %s99, 0
      %s102 = sadd.s32 %s101, 1
      %s103 = scalar_select %p100, %s101, %s102
      %p106 = pneg %p100
      %p107 = scmp.eq.s32.totalorder %s16, 1
      %p108 = por %p106, %p107
      %p109 = scmp.ne.s32.totalorder %s101, %s104
      %p110 = scmp.eq.s32.totalorder %s16, 0
      %p111 = por %p109, %p110
      %p112 = scmp.ne.s32.totalorder %s101, %s104
      %p113 = scmp.eq.s32.totalorder %s21, 1
      %p114 = por %p112, %p113
      %p115 = scmp.ne.s32.totalorder %s104, %s105
      %p116 = scmp.eq.s32.totalorder %s21, 0
      %p117 = por %p115, %p116
      %p118 = scmp.ne.s32.totalorder %s104, %s105
      %p119 = scmp.eq.s32.totalorder %s22, 1
      %p120 = por %p118, %p119
      %p122 = scmp.ne.s32.totalorder %s105, %s121
      %p123 = scmp.eq.s32.totalorder %s22, 0
      %p124 = por %p122, %p123
      %s125 = ssub.s32 %s23, %s42
      %s126 = ssub.s32 %s24, %s38
      %s127 = sor.u32 %s125, %s126
      %p128 = scmp.eq.s32.totalorder %s127, 0
      %s130 = sadd.s32 %s129, 1
      %s131 = scalar_select %p128, %s129, %s130
      %p134 = pneg %p128
      %p135 = scmp.eq.s32.totalorder %s16, 1
      %p136 = por %p134, %p135
      %p137 = scmp.ne.s32.totalorder %s129, %s132
      %p138 = scmp.eq.s32.totalorder %s16, 0
      %p139 = por %p137, %p138
      %p140 = scmp.ne.s32.totalorder %s129, %s132
      %p141 = scmp.eq.s32.totalorder %s21, 1
      %p142 = por %p140, %p141
      %p143 = scmp.ne.s32.totalorder %s132, %s133
      %p144 = scmp.eq.s32.totalorder %s21, 0
      %p145 = por %p143, %p144
      %p146 = scmp.ne.s32.totalorder %s132, %s133
      %p147 = scmp.eq.s32.totalorder %s22, 1
      %p148 = por %p146, %p147
      %p150 = scmp.ne.s32.totalorder %s133, %s149
      %p151 = scmp.eq.s32.totalorder %s22, 0
      %p152 = por %p150, %p151
      %p153 = scmp.le.s32.totalorder 1, %s16
      %p154 = scmp.lt.s32.totalorder %s16, 3
      %p155 = pnand %p153, %p154
      %p156 = pneg %p155
      // Predicated region
      $region9: #{tpu_custom_call.1} parent=5 // pred_check
        _
      $region10: #{tpu_custom_call.1} parent=5 // pred_check_branch
        %158 = sbr.rel (%p155) target = $region12
      $region11: #{tpu_custom_call.1} parent=5 // pred_region
        %s159 = ssub.s32 %s16, 1
        // Predicated region
        $region13: #{tpu_custom_call.1} parent=11 // pred_check
          %p160 = pneg %p91
        $region14: #{tpu_custom_call.1} parent=11 // pred_check_branch
          %162 = sbr.rel (%p160) target = $region16
        $region15: #{tpu_custom_call.1} parent=11 // pred_region
          %s163 = smul.u32 4, %s28
          %s165 = ssub.s32 256, 256
          %166 = vsyncadd [#allocation7], %s165
          %s167 = sadd.s32 %s27, %s163
          %s168 = smul.addr %s167, 64
          %s169 = scalar_lea.hbm %s1, %s168
          %s170 = sshll.u32 [#allocation6], 4
          %s171 = int_to_ptr.vmem [resolvable:$true] %s170
          %176 = dma.hbm_to_vmem [thread:$0]  %s169, 256, %s171, [#allocation7], 64, 64, 4
        $region16: #{tpu_custom_call.1} parent=11 // pred_fallthru
          _
        // Predicated region
        $region17: #{tpu_custom_call.1} parent=11 // pred_check
          %p177 = pneg %p117
        $region18: #{tpu_custom_call.1} parent=11 // pred_check_branch
          %179 = sbr.rel (%p177) target = $region20
        $region19: #{tpu_custom_call.1} parent=11 // pred_region
          %p180 = scmp.lt.s32.totalorder %s27, 0
          %s181 = scalar_select %p180, %s27, 0
          %s182 = scalar_lea.vmem %s2, %s181
        $region20: #{tpu_custom_call.1} parent=11 // pred_fallthru
          _
      $region12: #{tpu_custom_call.1} parent=5 // pred_fallthru
        _
      %p183 = scmp.lt.s32.totalorder %s16, 2
      // Predicated region
      $region21: #{tpu_custom_call.1} parent=5 // pred_check
        %p184 = pneg %p183
      $region22: #{tpu_custom_call.1} parent=5 // pred_check_branch
        %186 = sbr.rel (%p184) target = $region24
      $region23: #{tpu_custom_call.1} parent=5 // pred_region
        // Predicated region
        $region25: #{tpu_custom_call.1} parent=23 // pred_check
          %p187 = pneg %p57
        $region26: #{tpu_custom_call.1} parent=23 // pred_check_branch
          %189 = sbr.rel (%p187) target = $region28
        $region27: #{tpu_custom_call.1} parent=23 // pred_region
          %s190 = sand.u32 %s47, 1
          %s191 = scalar_lea.sflag [#allocation4], %s190
          %s192 = sand.u32 %s47, 1
          %s193 = smul.addr %s192, 4
          %s194 = scalar_lea.vmem [#allocation3], %s193
          %s196 = ssub.s32 64, 64
          %197 = vsyncadd %s191, %s196
          %s198 = sadd.s32 %s25, %s23
          %s199 = smul.addr %s198, 64
          %s200 = scalar_lea.hbm %s0, %s199
          %s202 = sshll.u32 %s194, 4
          %s203 = int_to_ptr.vmem [resolvable:$true] %s202
          %205 = dma.hbm_to_vmem [thread:$0]  %s200, 64, %s203, %s191
        $region28: #{tpu_custom_call.1} parent=23 // pred_fallthru
          _
      $region24: #{tpu_custom_call.1} parent=5 // pred_fallthru
        _
      %p206 = scmp.le.s32.totalorder 1, %s16
      %p207 = scmp.lt.s32.totalorder %s16, 3
      %p208 = pnand %p206, %p207
      %p209 = pneg %p208
      // Predicated region
      $region29: #{tpu_custom_call.1} parent=5 // pred_check
        _
      $region30: #{tpu_custom_call.1} parent=5 // pred_check_branch
        %211 = sbr.rel (%p208) target = $region32
      $region31: #{tpu_custom_call.1} parent=5 // pred_region
        %s212 = ssub.s32 %s16, 1
        %s213 = sand.u32 %s50, 1
        %s214 = scalar_lea.sflag [#allocation4], %s213
        %s215 = sand.u32 %s50, 1
        %s216 = smul.addr %s215, 4
        %s217 = scalar_lea.vmem [#allocation3], %s216
        // Predicated region
        $region33: #{tpu_custom_call.1} parent=31 // pred_check
          %p218 = pneg %p63
        $region34: #{tpu_custom_call.1} parent=31 // pred_check_branch
          %220 = sbr.rel (%p218) target = $region36
        $region35: #{tpu_custom_call.1} parent=31 // pred_region
          %221 = dma.done %s214, 64
        $region36: #{tpu_custom_call.1} parent=31 // pred_fallthru
          _
        // Predicated region
        $region37: #{tpu_custom_call.1} parent=31 // pred_check
          %p222 = pneg %p91
        $region38: #{tpu_custom_call.1} parent=31 // pred_check_branch
          %224 = sbr.rel (%p222) target = $region40
        $region39: #{tpu_custom_call.1} parent=31 // pred_region
          %225 = dma.done [#allocation7], 256
        $region40: #{tpu_custom_call.1} parent=31 // pred_fallthru
          _
        %s226 = sand.u32 %s50, 1
        %s227 = scalar_lea.sflag [#allocation4], %s226
        %s228 = sand.u32 %s50, 1
        %s229 = smul.addr %s228, 4
        %s230 = scalar_lea.vmem [#allocation3], %s229
        %p231 = pneg %p63
        %p232 = pneg %p60
        %p233 = pneg %p91
        %p234 = pneg %p88
        %p235 = scmp.lt.s32.totalorder %s27, 0
        %s236 = scalar_select %p235, %s27, 0
        %s237 = scalar_lea.vmem %s2, %s236
        %p238 = pneg %p117
        %p239 = pneg %p114
        %p240 = pneg %p145
        %p241 = pneg %p142
        %s242 = sand.u32 %s132, 1
        %s243 = scalar_lea.sflag [#allocation5], %s242
        %s244 = sand.u32 %s132, 1
        %s245 = smul.addr %s244, 8
        %s246 = scalar_lea.vmem [#allocation8], %s245
        %s247 = smul.u32 4, %s28
        %p248 = scmp.lt.s32.totalorder %s27, 0
        %s249 = scalar_select %p248, %s27, 0
        %s250 = scalar_lea.vmem %s2, %s249
        %p252 = scmp.eq.s32.totalorder %s28, 0
        // Predicated region
        $region41: #{tpu_custom_call.1} parent=31 // pred_check
          %p253 = pneg %p252
        $region42: #{tpu_custom_call.1} parent=31 // pred_check_branch
          %255 = sbr.rel (%p253) target = $region44
        $region43: #{tpu_custom_call.1} parent=31 // pred_region
          %256 = vst [vmem:[#allocation2] sm:$0xff] 0.0
        $region44: #{tpu_custom_call.1} parent=31 // pred_fallthru
          _
        %v257 = vld [vmem:[#allocation2] sm:$0xff]
        %v258 = vld [vmem:[%s217] sm:$0xf]
        %v259 = vld [vmem:[#allocation6] sm:$0xf]
        %v260 = vld [vmem:[#allocation6 + $0x4] sm:$0xf]
        %v261 = vld [vmem:[#allocation6 + $0x8] sm:$0xf]
        %v262 = vld [vmem:[#allocation6 + $0xc] sm:$0xf]
        %v267 = vunpack.c.l.b16 %v259
        %v268 = vunpack.c.l.b16 %v260
        %v269 = vunpack.c.l.b16 %v261
        %v270 = vunpack.c.l.b16 %v262
        %v271 = vpack.c.b16 %v268, %v267
        %v272 = vpack.c.b16 %v270, %v269
        %vm275 = vcmask 261120
        %v277 = vsel %vm275, %v258, 0
        %279 = vmatprep.subr.bf16.mxu0 0
        %280 = vmatpush1.bf16.msra.mxu0 %v271
        %281 = vmatprep.subr.bf16.mxu0 0
        %282 = vmatpush1.bf16.msra.mxu0 %v272
        %283 = vmatprep.subr.bf16.mxu0 0
        %284 = vmatpush1.bf16.msra.mxu0 0
        %285 = vmatprep.subr.bf16.mxu0 0
        %286 = vmatpush1.bf16.msra.mxu0 0
        %287 = vmatprep.subr.bf16.mxu0 0
        %288 = vmatpush1.bf16.msra.mxu0 0
        %289 = vmatprep.subr.bf16.mxu0 0
        %290 = vmatpush1.bf16.msra.mxu0 0
        %291 = vmatprep.subr.bf16.mxu0 0
        %292 = vmatpush1.bf16.msra.mxu0 0
        %293 = vmatprep.subr.bf16.mxu0 0
        %294 = vmatpush1.bf16.msra.mxu0 0
        %295 = vmatprep.subr.bf16.mxu0 0
        %296 = vmatpush1.bf16.msra.mxu0 0
        %297 = vmatprep.subr.bf16.mxu0 0
        %298 = vmatpush1.bf16.msra.mxu0 0
        %299 = vmatprep.subr.bf16.mxu0 0
        %300 = vmatpush1.bf16.msra.mxu0 0
        %301 = vmatprep.subr.bf16.mxu0 0
        %302 = vmatpush1.bf16.msra.mxu0 0
        %303 = vmatprep.subr.bf16.mxu0 0
        %304 = vmatpush1.bf16.msra.mxu0 0
        %305 = vmatprep.subr.bf16.mxu0 0
        %306 = vmatpush1.bf16.msra.mxu0 0
        %307 = vmatprep.subr.bf16.mxu0 0
        %308 = vmatpush1.bf16.msra.mxu0 0
        %309 = vmatprep.subr.bf16.mxu0 0
        %310 = vmatpush1.bf16.msra.mxu0 0
        %311 = vmatprep.mubr.bf16.mxu0 0
        %312 = vmatmul.mubr.bf16.gmra.mrb[0].mxu0 %v277
        %v313 = vpop.f32.mrb[0].mxu0
        %v314 = vadd.f32 0.0, %v313
        %v315 = vpop.f32.mrb[0].mxu0
        %v316 = vpop.f32.mrb[0].mxu0
        %v317 = vpop.f32.mrb[0].mxu0
        %318 = vdwg.mxu0
        %v319 = vadd.f32 %v257, %v314
        %320 = vst [vmem:[#allocation2] sm:$0xff] %v319
        // Predicated region
        $region45: #{tpu_custom_call.1} parent=31 // pred_check
          %p321 = pneg %p252
        $region46: #{tpu_custom_call.1} parent=31 // pred_check_branch
          %323 = sbr.rel (%p321) target = $region48
        $region47: #{tpu_custom_call.1} parent=31 // pred_region
          %v324 = vld [vmem:[#allocation2] sm:$0xff]
          %v325 = vld [vmem:[%s250] sm:$0x1]
          %v327 = vlaneseq
          %v328 = vshrl.u32 %v327, 7
          %v329 = vsub.s32 0, %v328
          %v330 = vrot.slane %v325, %v329
          %v332 = vadd.f32 %v324, %v330
          %v333 = vmax.f32 %v332, 0.0
          %334 = vst [vmem:[%s246] sm:$0xff] %v333
        $region48: #{tpu_custom_call.1} parent=31 // pred_fallthru
          _
        %s335 = sand.u32 %s132, 1
        %s336 = scalar_lea.sflag [#allocation5], %s335
        %s337 = sand.u32 %s132, 1
        %s338 = smul.addr %s337, 8
        %s339 = scalar_lea.vmem [#allocation8], %s338
        // Predicated region
        $region49: #{tpu_custom_call.1} parent=31 // pred_check
          %p340 = pneg %p142
        $region50: #{tpu_custom_call.1} parent=31 // pred_check_branch
          %342 = sbr.rel (%p340) target = $region52
        $region51: #{tpu_custom_call.1} parent=31 // pred_region
          %s344 = ssub.s32 128, 128
          %345 = vsyncadd %s336, %s344
          %s346 = sadd.s32 %s27, %s26
          %s347 = smul.addr %s346, 128
          %s348 = scalar_lea.hbm %s3, %s347
          %s350 = sshll.u32 %s339, 4
          %s351 = int_to_ptr.vmem [resolvable:$true] %s350
          %353 = dma.vmem_to_hbm [thread:$0]  %s351, 128, %s348, %s336
        $region52: #{tpu_custom_call.1} parent=31 // pred_fallthru
          _
      $region32: #{tpu_custom_call.1} parent=5 // pred_fallthru
        _
      %p354 = scmp.le.s32.totalorder 2, %s16
      // Predicated region
      $region53: #{tpu_custom_call.1} parent=5 // pred_check
        %p355 = pneg %p354
      $region54: #{tpu_custom_call.1} parent=5 // pred_check_branch
        %357 = sbr.rel (%p355) target = $region56
      $region55: #{tpu_custom_call.1} parent=5 // pred_region
        %s358 = ssub.s32 %s16, 2
        // Predicated region
        $region57: #{tpu_custom_call.1} parent=55 // pred_check
          %p359 = pneg %p148
        $region58: #{tpu_custom_call.1} parent=55 // pred_check_branch
          %361 = sbr.rel (%p359) target = $region60
        $region59: #{tpu_custom_call.1} parent=55 // pred_region
          %s362 = sand.u32 %s133, 1
          %s363 = scalar_lea.sflag [#allocation5], %s362
          %s364 = sand.u32 %s133, 1
          %s365 = smul.addr %s364, 8
          %s366 = scalar_lea.vmem [#allocation8], %s365
          %367 = dma.done %s363, 128
        $region60: #{tpu_custom_call.1} parent=55 // pred_fallthru
          _
      $region56: #{tpu_custom_call.1} parent=5 // pred_fallthru
        _
    $region6: #{tpu_custom_call.1} parent=1 // loop_footer
      %s20 = sadd.s32 1, %s16
    $region7: #{tpu_custom_call.1} parent=1 // loop_footer_branch
      %15 = sbr.rel target = $region3
    $region8: #{tpu_custom_call.1} parent=1 // loop_exit
      _
    %368 = vsyncpa [#allocation4], 1
    %s369 = scalar_lea.sflag [#allocation4], 1
    %370 = vsyncpa %s369, 1
    %371 = vsyncpa [#allocation7], 1
    %372 = vsyncpa [#allocation5], 1
    %s373 = scalar_lea.sflag [#allocation5], 1
    %374 = vsyncpa %s373, 1

</llo_original>
